<compile_context>
chip_gen: v6e
topology: v6e:2x2x1
jax: 0.10.0
libtpu: 0.0.40
codegen_flags: <defaults>
</compile_context>

<pallas_src>
import jax
import jax.numpy as jnp
from jax.experimental import pallas as pl
from jax.experimental.pallas import tpu as pltpu

EPS = 1e-5


def _converter_kernel(x_ref, eps_ref, p_ref, out_ref):
    L = eps_ref.shape[1]
    x = x_ref[...]            # (B, 3)
    eps = eps_ref[...]        # (B, L)
    p = p_ref[...]            # (15, max(9, 2L)) packed parameter slab

    # ---- Linear(3, 9) on the VPU (K=3, N=9: unrolled lane-broadcast FMA) ----
    # Linear1 bias intentionally omitted: training-mode BatchNorm subtracts the
    # batch mean of h, cancelling any constant bias exactly.
    h = x[:, 0:1] * p[0:1, 0:9]
    h = h + x[:, 1:2] * p[1:2, 0:9]
    h = h + x[:, 2:3] * p[2:3, 0:9]                       # (B, 9)

    # ---- BatchNorm1d(9), training mode (batch mean, biased var), fused ----
    mean = jnp.mean(h, axis=0, keepdims=True)             # (1, 9)
    c = h - mean
    var = jnp.mean(c * c, axis=0, keepdims=True)          # (1, 9)
    s = p[3:4, 0:9] * jax.lax.rsqrt(var + EPS)            # gamma * rsqrt(var+eps)
    t = jnp.tanh(c * s + p[4:5, 0:9])                     # fused scale+shift, Tanh

    # ---- fused heads: [mu | logvar] = t @ [Wmu | Wlv] + [bmu | blv] --------
    # Rows 5..13 of p hold the fused (9, 2L) weight, row 14 the fused bias.
    heads = p[14:15, 0:2 * L] + t[:, 0:1] * p[5:6, 0:2 * L]   # (B, 2L)
    for k in range(1, 9):                                 # static unroll
        heads = heads + t[:, k:k + 1] * p[5 + k:6 + k, 0:2 * L]

    mu = heads[:, 0:L]                                    # (B, L)
    lv = heads[:, L:2 * L]                                # (B, L)

    # ---- reparameterize ----
    z = mu + eps * jnp.exp(0.5 * lv)                      # (B, L)

    # ---- single lane-dense packed store: [z | mu | logvar | zero-pad] ----
    out = jnp.concatenate([z, heads], axis=-1)            # (B, 3L)
    pad = out_ref.shape[1] - 3 * L
    if pad:
        out = jnp.concatenate(
            [out, jnp.zeros((out.shape[0], pad), out.dtype)], axis=-1)
    out_ref[...] = out.astype(out_ref.dtype)


def _pack_params(w1, gamma, beta, wmu, bmu, wlv, blv):
    """Pack all parameters into one (15, max(9, 2L)) f32 slab (single DMA)."""
    L = wmu.shape[1]
    C = max(9, 2 * L)

    def rows(a, width):
        a = jnp.asarray(a, jnp.float32).reshape(-1, width)
        return jnp.pad(a, ((0, 0), (0, C - width)))

    w_heads = jnp.concatenate(
        [jnp.asarray(wmu, jnp.float32), jnp.asarray(wlv, jnp.float32)], axis=1)        # (9, 2L)
    b_heads = jnp.concatenate(
        [jnp.asarray(bmu, jnp.float32).reshape(1, L),
         jnp.asarray(blv, jnp.float32).reshape(1, L)], axis=1)                         # (1, 2L)

    return jnp.concatenate([
        rows(w1, 9),            # rows 0..2   Linear1 weight  (= PyTorch W1.T, (3, 9))
        rows(gamma, 9),         # row  3      BN gamma
        rows(beta, 9),          # row  4      BN beta
        rows(w_heads, 2 * L),   # rows 5..13  fused [Wmu | Wlv] (9, 2L)
        rows(b_heads, 2 * L),   # row  14     fused [bmu | blv] (1, 2L)
    ], axis=0)


def converter_p2l(x, eps, w1, gamma, beta, wmu, bmu, wlv, blv):
    """x: (B, 3) f32, eps: (B, L) ~ N(0,1)  ->  (z, mu, logvar), each (B, L).

    Linear weights are transposed relative to PyTorch. The Linear1 bias is not
    an input: it is cancelled exactly by training-mode BatchNorm.
    """
    B = x.shape[0]
    L = eps.shape[1]
    p = _pack_params(w1, gamma, beta, wmu, bmu, wlv, blv)
    out_w = ((3 * L + 127) // 128) * 128   # lane-dense output width

    vmem = pl.BlockSpec(memory_space=pltpu.MemorySpace.VMEM)
    out = pl.pallas_call(
        _converter_kernel,
        out_shape=jax.ShapeDtypeStruct((B, out_w), jnp.float32),
        in_specs=[vmem, vmem, vmem],
        out_specs=vmem,
    )(x, eps, p)
    return out[:, 0:L], out[:, L:2 * L], out[:, 2 * L:3 * L]


def _reference(x, eps, w1, b1, gamma, beta, wmu, bmu, wlv, blv):
    h = x @ w1 + b1
    mean = jnp.mean(h, axis=0, keepdims=True)
    var = jnp.mean((h - mean) ** 2, axis=0, keepdims=True)
    hn = (h - mean) / jnp.sqrt(var + EPS) * gamma + beta
    t = jnp.tanh(hn)
    mu = t @ wmu + bmu
    logvar = t @ wlv + blv
    z = mu + eps * jnp.exp(0.5 * logvar)
    return z, mu, logvar


if __name__ == "__main__":
    B, latent_dim = 8, 32

    key = jax.random.PRNGKey(0)
    ks = jax.random.split(key, 10)

    x = jax.random.normal(ks[0], (B, 3), dtype=jnp.float32)
    eps = jax.random.normal(ks[1], (B, latent_dim), dtype=jnp.float32)

    # Deterministic synthetic parameters (PyTorch-layout transposed already).
    w1 = jax.random.normal(ks[2], (3, 9), dtype=jnp.float32) * 0.3
    b1 = jax.random.normal(ks[3], (1, 9), dtype=jnp.float32) * 0.3  # ref-only: cancelled by BN
    gamma = 1.0 + 0.1 * jax.random.normal(ks[4], (1, 9), dtype=jnp.float32)
    beta = 0.1 * jax.random.normal(ks[5], (1, 9), dtype=jnp.float32)
    wmu = jax.random.normal(ks[6], (9, latent_dim), dtype=jnp.float32) * 0.2
    bmu = 0.1 * jax.random.normal(ks[7], (1, latent_dim), dtype=jnp.float32)
    wlv = jax.random.normal(ks[8], (9, latent_dim), dtype=jnp.float32) * 0.2
    blv = 0.1 * jax.random.normal(ks[9], (1, latent_dim), dtype=jnp.float32)

    z, mu, logvar = converter_p2l(x, eps, w1, gamma, beta, wmu, bmu, wlv, blv)
    (z, mu, logvar) = jax.block_until_ready((z, mu, logvar))

    z_ref, mu_ref, lv_ref = _reference(x, eps, w1, b1, gamma, beta,
                                       wmu, bmu, wlv, blv)
    assert z.shape == (B, latent_dim)
    assert mu.shape == (B, latent_dim) and logvar.shape == (B, latent_dim)
    assert jnp.allclose(mu, mu_ref, atol=1e-4, rtol=1e-4), (mu, mu_ref)
    assert jnp.allclose(logvar, lv_ref, atol=1e-4, rtol=1e-4), (logvar, lv_ref)
    assert jnp.allclose(z, z_ref, atol=1e-4, rtol=1e-4), (z, z_ref)

    print("KERNEL_OK")
</pallas_src>

<mosaic_0001>
module attributes {stable_mosaic.version = 11 : i64} {
  func.func @_converter_kernel(%arg0: memref<8x3xf32, #tpu.memory_space<vmem>>, %arg1: memref<8x32xf32, #tpu.memory_space<vmem>>, %arg2: memref<15x64xf32, #tpu.memory_space<vmem>>, %arg3: memref<8x128xf32, #tpu.memory_space<vmem>>) attributes {dimension_semantics = [], scalar_prefetch = 0 : i64, scratch_operands = 0 : i64, tpu.core_type = #tpu.core_type<tc>} {
    %c0 = arith.constant 0 : index
    %c0_0 = arith.constant 0 : index
    %0 = vector.load %arg0[%c0, %c0_0] : memref<8x3xf32, #tpu.memory_space<vmem>>, vector<8x3xf32>
    %c0_1 = arith.constant 0 : index
    %c0_2 = arith.constant 0 : index
    %1 = vector.load %arg1[%c0_1, %c0_2] : memref<8x32xf32, #tpu.memory_space<vmem>>, vector<8x32xf32>
    %c0_3 = arith.constant 0 : index
    %c0_4 = arith.constant 0 : index
    %2 = vector.load %arg2[%c0_3, %c0_4] : memref<15x64xf32, #tpu.memory_space<vmem>>, vector<15x64xf32>
    %3 = vector.extract_strided_slice %0 {offsets = [0, 0], sizes = [8, 1], strides = [1, 1]} : vector<8x3xf32> to vector<8x1xf32>
    %4 = vector.extract_strided_slice %2 {offsets = [0, 0], sizes = [1, 9], strides = [1, 1]} : vector<15x64xf32> to vector<1x9xf32>
    %5 = vector.broadcast %3 : vector<8x1xf32> to vector<8x9xf32>
    %6 = vector.broadcast %4 : vector<1x9xf32> to vector<8x9xf32>
    %7 = arith.mulf %5, %6 : vector<8x9xf32>
    %8 = vector.extract_strided_slice %0 {offsets = [0, 1], sizes = [8, 1], strides = [1, 1]} : vector<8x3xf32> to vector<8x1xf32>
    %9 = vector.extract_strided_slice %2 {offsets = [1, 0], sizes = [1, 9], strides = [1, 1]} : vector<15x64xf32> to vector<1x9xf32>
    %10 = vector.broadcast %8 : vector<8x1xf32> to vector<8x9xf32>
    %11 = vector.broadcast %9 : vector<1x9xf32> to vector<8x9xf32>
    %12 = arith.mulf %10, %11 : vector<8x9xf32>
    %13 = arith.addf %7, %12 : vector<8x9xf32>
    %14 = vector.extract_strided_slice %0 {offsets = [0, 2], sizes = [8, 1], strides = [1, 1]} : vector<8x3xf32> to vector<8x1xf32>
    %15 = vector.extract_strided_slice %2 {offsets = [2, 0], sizes = [1, 9], strides = [1, 1]} : vector<15x64xf32> to vector<1x9xf32>
    %16 = vector.broadcast %14 : vector<8x1xf32> to vector<8x9xf32>
    %17 = vector.broadcast %15 : vector<1x9xf32> to vector<8x9xf32>
    %18 = arith.mulf %16, %17 : vector<8x9xf32>
    %19 = arith.addf %13, %18 : vector<8x9xf32>
    %cst = arith.constant dense<0.000000e+00> : vector<9xf32>
    %20 = vector.multi_reduction <add>, %19, %cst [0] : vector<8x9xf32> to vector<9xf32>
    %21 = vector.shape_cast %20 : vector<9xf32> to vector<1x9xf32>
    %cst_5 = arith.constant 8.000000e+00 : f32
    %22 = vector.broadcast %cst_5 : f32 to vector<1x9xf32>
    %23 = arith.divf %21, %22 : vector<1x9xf32>
    %24 = vector.broadcast %23 : vector<1x9xf32> to vector<8x9xf32>
    %25 = arith.subf %19, %24 : vector<8x9xf32>
    %26 = arith.mulf %25, %25 : vector<8x9xf32>
    %cst_6 = arith.constant dense<0.000000e+00> : vector<9xf32>
    %27 = vector.multi_reduction <add>, %26, %cst_6 [0] : vector<8x9xf32> to vector<9xf32>
    %28 = vector.shape_cast %27 : vector<9xf32> to vector<1x9xf32>
    %cst_7 = arith.constant 8.000000e+00 : f32
    %29 = vector.broadcast %cst_7 : f32 to vector<1x9xf32>
    %30 = arith.divf %28, %29 : vector<1x9xf32>
    %31 = vector.extract_strided_slice %2 {offsets = [3, 0], sizes = [1, 9], strides = [1, 1]} : vector<15x64xf32> to vector<1x9xf32>
    %cst_8 = arith.constant 9.99999974E-6 : f32
    %32 = vector.broadcast %cst_8 : f32 to vector<1x9xf32>
    %33 = arith.addf %30, %32 : vector<1x9xf32>
    %34 = math.rsqrt %33 : vector<1x9xf32>
    %35 = arith.mulf %31, %34 : vector<1x9xf32>
    %36 = vector.broadcast %35 : vector<1x9xf32> to vector<8x9xf32>
    %37 = arith.mulf %25, %36 : vector<8x9xf32>
    %38 = vector.extract_strided_slice %2 {offsets = [4, 0], sizes = [1, 9], strides = [1, 1]} : vector<15x64xf32> to vector<1x9xf32>
    %39 = vector.broadcast %38 : vector<1x9xf32> to vector<8x9xf32>
    %40 = arith.addf %37, %39 : vector<8x9xf32>
    %41 = math.tanh %40 : vector<8x9xf32>
    %42 = vector.extract_strided_slice %2 {offsets = [14, 0], sizes = [1, 64], strides = [1, 1]} : vector<15x64xf32> to vector<1x64xf32>
    %43 = vector.extract_strided_slice %41 {offsets = [0, 0], sizes = [8, 1], strides = [1, 1]} : vector<8x9xf32> to vector<8x1xf32>
    %44 = vector.extract_strided_slice %2 {offsets = [5, 0], sizes = [1, 64], strides = [1, 1]} : vector<15x64xf32> to vector<1x64xf32>
    %45 = vector.broadcast %43 : vector<8x1xf32> to vector<8x64xf32>
    %46 = vector.broadcast %44 : vector<1x64xf32> to vector<8x64xf32>
    %47 = arith.mulf %45, %46 : vector<8x64xf32>
    %48 = vector.broadcast %42 : vector<1x64xf32> to vector<8x64xf32>
    %49 = arith.addf %48, %47 : vector<8x64xf32>
    %50 = vector.extract_strided_slice %41 {offsets = [0, 1], sizes = [8, 1], strides = [1, 1]} : vector<8x9xf32> to vector<8x1xf32>
    %51 = vector.extract_strided_slice %2 {offsets = [6, 0], sizes = [1, 64], strides = [1, 1]} : vector<15x64xf32> to vector<1x64xf32>
    %52 = vector.broadcast %50 : vector<8x1xf32> to vector<8x64xf32>
    %53 = vector.broadcast %51 : vector<1x64xf32> to vector<8x64xf32>
    %54 = arith.mulf %52, %53 : vector<8x64xf32>
    %55 = arith.addf %49, %54 : vector<8x64xf32>
    %56 = vector.extract_strided_slice %41 {offsets = [0, 2], sizes = [8, 1], strides = [1, 1]} : vector<8x9xf32> to vector<8x1xf32>
    %57 = vector.extract_strided_slice %2 {offsets = [7, 0], sizes = [1, 64], strides = [1, 1]} : vector<15x64xf32> to vector<1x64xf32>
    %58 = vector.broadcast %56 : vector<8x1xf32> to vector<8x64xf32>
    %59 = vector.broadcast %57 : vector<1x64xf32> to vector<8x64xf32>
    %60 = arith.mulf %58, %59 : vector<8x64xf32>
    %61 = arith.addf %55, %60 : vector<8x64xf32>
    %62 = vector.extract_strided_slice %41 {offsets = [0, 3], sizes = [8, 1], strides = [1, 1]} : vector<8x9xf32> to vector<8x1xf32>
    %63 = vector.extract_strided_slice %2 {offsets = [8, 0], sizes = [1, 64], strides = [1, 1]} : vector<15x64xf32> to vector<1x64xf32>
    %64 = vector.broadcast %62 : vector<8x1xf32> to vector<8x64xf32>
    %65 = vector.broadcast %63 : vector<1x64xf32> to vector<8x64xf32>
    %66 = arith.mulf %64, %65 : vector<8x64xf32>
    %67 = arith.addf %61, %66 : vector<8x64xf32>
    %68 = vector.extract_strided_slice %41 {offsets = [0, 4], sizes = [8, 1], strides = [1, 1]} : vector<8x9xf32> to vector<8x1xf32>
    %69 = vector.extract_strided_slice %2 {offsets = [9, 0], sizes = [1, 64], strides = [1, 1]} : vector<15x64xf32> to vector<1x64xf32>
    %70 = vector.broadcast %68 : vector<8x1xf32> to vector<8x64xf32>
    %71 = vector.broadcast %69 : vector<1x64xf32> to vector<8x64xf32>
    %72 = arith.mulf %70, %71 : vector<8x64xf32>
    %73 = arith.addf %67, %72 : vector<8x64xf32>
    %74 = vector.extract_strided_slice %41 {offsets = [0, 5], sizes = [8, 1], strides = [1, 1]} : vector<8x9xf32> to vector<8x1xf32>
    %75 = vector.extract_strided_slice %2 {offsets = [10, 0], sizes = [1, 64], strides = [1, 1]} : vector<15x64xf32> to vector<1x64xf32>
    %76 = vector.broadcast %74 : vector<8x1xf32> to vector<8x64xf32>
    %77 = vector.broadcast %75 : vector<1x64xf32> to vector<8x64xf32>
    %78 = arith.mulf %76, %77 : vector<8x64xf32>
    %79 = arith.addf %73, %78 : vector<8x64xf32>
    %80 = vector.extract_strided_slice %41 {offsets = [0, 6], sizes = [8, 1], strides = [1, 1]} : vector<8x9xf32> to vector<8x1xf32>
    %81 = vector.extract_strided_slice %2 {offsets = [11, 0], sizes = [1, 64], strides = [1, 1]} : vector<15x64xf32> to vector<1x64xf32>
    %82 = vector.broadcast %80 : vector<8x1xf32> to vector<8x64xf32>
    %83 = vector.broadcast %81 : vector<1x64xf32> to vector<8x64xf32>
    %84 = arith.mulf %82, %83 : vector<8x64xf32>
    %85 = arith.addf %79, %84 : vector<8x64xf32>
    %86 = vector.extract_strided_slice %41 {offsets = [0, 7], sizes = [8, 1], strides = [1, 1]} : vector<8x9xf32> to vector<8x1xf32>
    %87 = vector.extract_strided_slice %2 {offsets = [12, 0], sizes = [1, 64], strides = [1, 1]} : vector<15x64xf32> to vector<1x64xf32>
    %88 = vector.broadcast %86 : vector<8x1xf32> to vector<8x64xf32>
    %89 = vector.broadcast %87 : vector<1x64xf32> to vector<8x64xf32>
    %90 = arith.mulf %88, %89 : vector<8x64xf32>
    %91 = arith.addf %85, %90 : vector<8x64xf32>
    %92 = vector.extract_strided_slice %41 {offsets = [0, 8], sizes = [8, 1], strides = [1, 1]} : vector<8x9xf32> to vector<8x1xf32>
    %93 = vector.extract_strided_slice %2 {offsets = [13, 0], sizes = [1, 64], strides = [1, 1]} : vector<15x64xf32> to vector<1x64xf32>
    %94 = vector.broadcast %92 : vector<8x1xf32> to vector<8x64xf32>
    %95 = vector.broadcast %93 : vector<1x64xf32> to vector<8x64xf32>
    %96 = arith.mulf %94, %95 : vector<8x64xf32>
    %97 = arith.addf %91, %96 : vector<8x64xf32>
    %98 = vector.extract_strided_slice %97 {offsets = [0, 0], sizes = [8, 32], strides = [1, 1]} : vector<8x64xf32> to vector<8x32xf32>
    %99 = vector.extract_strided_slice %97 {offsets = [0, 32], sizes = [8, 32], strides = [1, 1]} : vector<8x64xf32> to vector<8x32xf32>
    %cst_9 = arith.constant 5.000000e-01 : f32
    %100 = vector.broadcast %cst_9 : f32 to vector<8x32xf32>
    %101 = arith.mulf %100, %99 : vector<8x32xf32>
    %102 = math.exp %101 : vector<8x32xf32>
    %103 = arith.mulf %1, %102 : vector<8x32xf32>
    %104 = arith.addf %98, %103 : vector<8x32xf32>
    %105 = tpu.concatenate %104, %97 in 1 : vector<8x32xf32>, vector<8x64xf32> -> vector<8x96xf32>
    %cst_10 = arith.constant 0.000000e+00 : f32
    %106 = vector.broadcast %cst_10 : f32 to vector<8x32xf32>
    %107 = tpu.concatenate %105, %106 in 1 : vector<8x96xf32>, vector<8x32xf32> -> vector<8x128xf32>
    %c0_11 = arith.constant 0 : index
    %c0_12 = arith.constant 0 : index
    %108 = vector.load %arg3[%c0_11, %c0_12] : memref<8x128xf32, #tpu.memory_space<vmem>>, vector<8x128xf32>
    tpu.vector_store %arg3[%c0_11, %c0_12], %107 {strides = array<i32>} : memref<8x128xf32, #tpu.memory_space<vmem>>, vector<8x128xf32>,
    return
  }
}

</mosaic_0001>

<llo_original>
// kernel: tpu_custom_call.1
$region0: #{tpu_custom_call.1}
  #allocation0 [shape = 'u32[]', space=smem, size = 0x4, offset = 0x4, fixed_abs, tag = 'smem constant byte address 0x4 - core index']
  #allocation1 [shape = 'u32[144,128]{1,0:T(1,128)}', space=vmem, size = 0x12000, scoped, tag = 'internal scratch']
  %s0 = inlined_call_operand.vmem [shape: f32[8,3], index: 0, kind: input, shape index: {}]
  %s1 = inlined_call_operand.vmem [shape: f32[8,32], index: 1, kind: input, shape index: {}]
  %s2 = inlined_call_operand.hbm [shape: f32[15,64], index: 2, kind: input, shape index: {}]
  %s3 = inlined_call_operand.hbm [shape: f32[8,128], index: 3, kind: output, shape index: {}]
  %s4 = sld [smem:[#allocation0]]
  $region26: #{tpu_custom_call.1} parent=0
    _
  %s6 = ssub.s32 1, %s4
  %s7 = scalar_select 0, %s6, %s4
  $region1: #{tpu_custom_call.1} parent=0
    #allocation2 [shape = 'u8[8192]{0}', space=vmem, size = 0x2000, scoped, tag = 'input window, operand 2, single buffered']
    #allocation3 [shape = 's32[1]{0}', space=sflag, size = 0x4, scoped, tag = 'scoped memory for tpu_custom_call.1']
    #allocation4 [shape = 's32[1]{0}', space=sflag, size = 0x4, scoped, tag = 'scoped memory for tpu_custom_call.1']
    #allocation5 [shape = 'u8[4096]{0}', space=vmem, size = 0x1000, scoped, tag = 'output window, operand 0, single buffered']
    %8 = vsyncpa [#allocation3], 0
    %9 = vsyncpa [#allocation4], 0
    // Predicated region
    $region2: #{tpu_custom_call.1} parent=1 // pred_check
      _
    $region3: #{tpu_custom_call.1} parent=1 // pred_check_branch
      %11 = sbr.rel (0) target = $region5
    $region4: #{tpu_custom_call.1} parent=1 // pred_region
      _
    $region5: #{tpu_custom_call.1} parent=1 // pred_fallthru
      _
    // Predicated region
    $region6: #{tpu_custom_call.1} parent=1 // pred_check
      _
    $region7: #{tpu_custom_call.1} parent=1 // pred_check_branch
      %13 = sbr.rel (0) target = $region9
    $region8: #{tpu_custom_call.1} parent=1 // pred_region
      _
    $region9: #{tpu_custom_call.1} parent=1 // pred_fallthru
      _
    // Predicated region
    $region10: #{tpu_custom_call.1} parent=1 // pred_check
      _
    $region11: #{tpu_custom_call.1} parent=1 // pred_check_branch
      %15 = sbr.rel (0) target = $region13
    $region12: #{tpu_custom_call.1} parent=1 // pred_region
      %s17 = ssub.s32 256, 256
      %18 = vsyncadd [#allocation3], %s17
      %s19 = sshll.u32 [#allocation2], 4
      %s20 = int_to_ptr.vmem [resolvable:$true] %s19
      %25 = dma.hbm_to_vmem [thread:$0]  %s2, 256, %s20, [#allocation3], 128, 128, 8
    $region13: #{tpu_custom_call.1} parent=1 // pred_fallthru
      _
    // Predicated region
    $region14: #{tpu_custom_call.1} parent=1 // pred_check
      _
    $region15: #{tpu_custom_call.1} parent=1 // pred_check_branch
      %27 = sbr.rel (0) target = $region17
    $region16: #{tpu_custom_call.1} parent=1 // pred_region
      %28 = dma.done [#allocation3], 256
    $region17: #{tpu_custom_call.1} parent=1 // pred_fallthru
      _
    %v29 = vld [vmem:[%s0] sm:$0xff]
    %v30 = vld [vmem:[%s1] sm:$0xff]
    %v31 = vld [vmem:[#allocation2] sm:$0xff]
    %v32 = vld [vmem:[#allocation2 + $0x8] sm:$0x7f]
    %34 = vset.pattern.permute.xlu0 0
    %35 = vperm.xlu0 %34, %v29
    %v36 = vpop.permute.xlu0 %35
    %v38 = vlaneseq
    %v39 = vshrl.u32 %v38, 7
    %v40 = vsub.s32 0, %v39
    %v41 = vrot.slane %v31, %v40
    %v42 = vmul.f32 %v36, %v41
    %43 = vset.pattern.permute.xlu0 1
    %44 = vperm.xlu0 %43, %v29
    %v45 = vpop.permute.xlu0 %44
    %v47 = vlaneseq
    %v48 = vshrl.u32 %v47, 7
    %v49 = vsub.s32 1, %v48
    %v50 = vrot.slane %v31, %v49
    %v51 = vmul.f32 %v45, %v50
    %v52 = vadd.f32 %v42, %v51
    %53 = vset.pattern.permute.xlu0 2
    %54 = vperm.xlu0 %53, %v29
    %v55 = vpop.permute.xlu0 %54
    %v57 = vlaneseq
    %v58 = vshrl.u32 %v57, 7
    %v59 = vsub.s32 2, %v58
    %v60 = vrot.slane %v31, %v59
    %v61 = vmul.f32 %v55, %v60
    %v62 = vadd.f32 %v52, %v61
    %vm63 = vcmask 72704
    %v64 = vsel %vm63, %v62, 0.0
    %v65 = vrot.slane %v64, 4
    %v66 = vadd.f32 %v64, %v65
    %v67 = vrot.slane %v66, 2
    %v68 = vadd.f32 %v66, %v67
    %v69 = vrot.slane %v68, 1
    %v70 = vadd.f32 %v68, %v69
    %v71 = vrcp.pop 8.0
    %v72 = vmul.f32 %v70, %v71
    %v73 = vsub.f32 %v62, %v72
    %v74 = vmul.f32 %v73, %v73
    %v75 = vsel %vm63, %v74, 0.0
    %v76 = vrot.slane %v75, 4
    %v77 = vadd.f32 %v75, %v76
    %v78 = vrot.slane %v77, 2
    %v79 = vadd.f32 %v77, %v78
    %v80 = vrot.slane %v79, 1
    %v81 = vadd.f32 %v79, %v80
    %v82 = vmul.f32 %v81, %v71
    %v83 = vadd.f32 %v82, 1e-05
    %v84 = vrsqrt.pop %v83
    %v85 = vmul.f32 %v31, %v84
    %v86 = vlaneseq
    %v87 = vshrl.u32 %v86, 7
    %v88 = vsub.s32 3, %v87
    %v89 = vrot.slane %v85, %v88
    %v90 = vmul.f32 %v73, %v89
    %v91 = vlaneseq
    %v92 = vshrl.u32 %v91, 7
    %v93 = vsub.s32 4, %v92
    %v94 = vrot.slane %v31, %v93
    %v95 = vadd.f32 %v90, %v94
    %v96 = vtanh.pop %v95
    %98 = vset.pattern.permute.xlu0 0
    %99 = vperm.xlu0 %98, %v96
    %v100 = vpop.permute.xlu0 %99
    %v102 = vlaneseq
    %v103 = vshrl.u32 %v102, 7
    %v104 = vsub.s32 5, %v103
    %v105 = vrot.slane %v31, %v104
    %v106 = vmul.f32 %v100, %v105
    %v107 = vlaneseq
    %v108 = vshrl.u32 %v107, 7
    %v109 = vsub.s32 6, %v108
    %v110 = vrot.slane %v32, %v109
    %v111 = vadd.f32 %v110, %v106
    %112 = vset.pattern.permute.xlu0 1
    %113 = vperm.xlu0 %112, %v96
    %v114 = vpop.permute.xlu0 %113
    %v116 = vlaneseq
    %v117 = vshrl.u32 %v116, 7
    %v118 = vsub.s32 6, %v117
    %v119 = vrot.slane %v31, %v118
    %v120 = vmul.f32 %v114, %v119
    %v121 = vadd.f32 %v111, %v120
    %122 = vset.pattern.permute.xlu0 2
    %123 = vperm.xlu0 %122, %v96
    %v124 = vpop.permute.xlu0 %123
    %v126 = vlaneseq
    %v127 = vshrl.u32 %v126, 7
    %v128 = vsub.s32 7, %v127
    %v129 = vrot.slane %v31, %v128
    %v130 = vmul.f32 %v124, %v129
    %v131 = vadd.f32 %v121, %v130
    %132 = vset.pattern.permute.xlu0 3
    %133 = vperm.xlu0 %132, %v96
    %v134 = vpop.permute.xlu0 %133
    %v136 = vlaneseq
    %v137 = vshrl.u32 %v136, 7
    %v138 = vsub.s32 0, %v137
    %v139 = vrot.slane %v32, %v138
    %v140 = vmul.f32 %v134, %v139
    %v141 = vadd.f32 %v131, %v140
    %142 = vset.pattern.permute.xlu0 4
    %143 = vperm.xlu0 %142, %v96
    %v144 = vpop.permute.xlu0 %143
    %v146 = vlaneseq
    %v147 = vshrl.u32 %v146, 7
    %v148 = vsub.s32 1, %v147
    %v149 = vrot.slane %v32, %v148
    %v150 = vmul.f32 %v144, %v149
    %v151 = vadd.f32 %v141, %v150
    %152 = vset.pattern.permute.xlu0 5
    %153 = vperm.xlu0 %152, %v96
    %v154 = vpop.permute.xlu0 %153
    %v156 = vlaneseq
    %v157 = vshrl.u32 %v156, 7
    %v158 = vsub.s32 2, %v157
    %v159 = vrot.slane %v32, %v158
    %v160 = vmul.f32 %v154, %v159
    %v161 = vadd.f32 %v151, %v160
    %162 = vset.pattern.permute.xlu0 6
    %163 = vperm.xlu0 %162, %v96
    %v164 = vpop.permute.xlu0 %163
    %v166 = vlaneseq
    %v167 = vshrl.u32 %v166, 7
    %v168 = vsub.s32 3, %v167
    %v169 = vrot.slane %v32, %v168
    %v170 = vmul.f32 %v164, %v169
    %v171 = vadd.f32 %v161, %v170
    %172 = vset.pattern.permute.xlu0 7
    %173 = vperm.xlu0 %172, %v96
    %v174 = vpop.permute.xlu0 %173
    %v176 = vlaneseq
    %v177 = vshrl.u32 %v176, 7
    %v178 = vsub.s32 4, %v177
    %v179 = vrot.slane %v32, %v178
    %v180 = vmul.f32 %v174, %v179
    %v181 = vadd.f32 %v171, %v180
    %182 = vset.pattern.permute.xlu0 8
    %183 = vperm.xlu0 %182, %v96
    %v184 = vpop.permute.xlu0 %183
    %v186 = vlaneseq
    %v187 = vshrl.u32 %v186, 7
    %v188 = vsub.s32 5, %v187
    %v189 = vrot.slane %v32, %v188
    %v190 = vmul.f32 %v184, %v189
    %v191 = vadd.f32 %v181, %v190
    %v192 = vmul.f32 %v191, 0.5
    %v193 = vmul.f32 %v192, 1.442695
    %v194 = vpow.pop %v193
    %196 = vrot.lane.b32.xlu0 %v194, 96
    %v197 = vpop.permute.xlu0 %196
    %v199 = vmul.f32 %v30, %v197
    %v200 = vadd.f32 %v191, %v199
    %202 = vrot.lane.b32.xlu0 %v191, 32
    %v203 = vpop.permute.xlu0 %202
    %vm205 = vcmask 261120
    %v206 = vsel %vm205, %v200, %v203
    %vm207 = vcmask 785408
    %v208 = vsel %vm207, %v206, 0.0
    %209 = vst [vmem:[#allocation5] sm:$0xff] %v208
    // Predicated region
    $region18: #{tpu_custom_call.1} parent=1 // pred_check
      _
    $region19: #{tpu_custom_call.1} parent=1 // pred_check_branch
      %211 = sbr.rel (0) target = $region21
    $region20: #{tpu_custom_call.1} parent=1 // pred_region
      %s213 = ssub.s32 128, 128
      %214 = vsyncadd [#allocation4], %s213
      %s216 = sshll.u32 [#allocation5], 4
      %s217 = int_to_ptr.vmem [resolvable:$true] %s216
      %219 = dma.vmem_to_hbm [thread:$0]  %s217, 128, %s3, [#allocation4]
    $region21: #{tpu_custom_call.1} parent=1 // pred_fallthru
      _
    // Predicated region
    $region22: #{tpu_custom_call.1} parent=1 // pred_check
      _
    $region23: #{tpu_custom_call.1} parent=1 // pred_check_branch
      %221 = sbr.rel (0) target = $region25
    $region24: #{tpu_custom_call.1} parent=1 // pred_region
      %222 = dma.done [#allocation4], 128
    $region25: #{tpu_custom_call.1} parent=1 // pred_fallthru
      _
    %223 = vsyncpa [#allocation3], 1
    %224 = vsyncpa [#allocation4], 1

</llo_original>
